<compile_context>
chip_gen: v6e
topology: v6e:2x2x1
jax: 0.10.0
libtpu: 0.0.40
codegen_flags: <defaults>
</compile_context>

<pallas_src>
import functools
import math

import jax
import jax.numpy as jnp
import numpy as np
from jax.experimental import pallas as pl
from jax.experimental.pallas import tpu as pltpu

_LANES = 128
_NCORES = 2          # leading "parallel" grid axis (megacore split on v7x)
_OUT_SUB = 8         # per-core output written as a full (8, 128) block


def _round_up(v, m):
    return (v + m - 1) // m * m


def _amp_loss_kernel(x_ref, y_ref, cw_ref, mblk_ref, out_ref, acc_ref, *,
                     n_planes, h, wfp, inv_total, use_bf16):
    i = pl.program_id(1)

    @pl.when(i == 0)
    def _():
        acc_ref[...] = jnp.zeros_like(acc_ref)

    # ---- Stage 1: rfft along W for all 2*B planes (x stacked over y) --------
    xy = jnp.concatenate([x_ref[...], y_ref[...]], axis=0)        # (2B*H, W)
    cw = cw_ref[...]                                              # (W, 2*Wfp)
    if use_bf16:
        xy = xy.astype(jnp.bfloat16)
        cw = cw.astype(jnp.bfloat16)
    z = jnp.dot(xy, cw, preferred_element_type=jnp.float32)       # (2B*H, 2*Wfp)

    # ---- Re-layout: plane index -> lanes, real/imag -> sublanes -------------
    #   s[:H]  = [ R1(plane 0) | R1(plane 1) | ... ]   (H, 2B*Wfp)
    #   s[H:]  = [ I1(plane 0) | I1(plane 1) | ... ]
    # (row slices are sublane-aligned for H % 8 == 0, column slices are
    #  128-aligned because Wfp is a multiple of 128 -> whole-vreg moves)
    p2 = 2 * n_planes
    s_re = jnp.concatenate([z[p * h:(p + 1) * h, :wfp] for p in range(p2)],
                           axis=1)
    s_im = jnp.concatenate([z[p * h:(p + 1) * h, wfp:] for p in range(p2)],
                           axis=1)
    s = jnp.concatenate([s_re, s_im], axis=0)                     # (2H, 2B*Wfp)

    # ---- Stage 2: full FFT along H for all planes in ONE matmul -------------
    mblk = mblk_ref[...]                                          # (2H, 2H)
    if use_bf16:
        s = s.astype(jnp.bfloat16)
        mblk = mblk.astype(jnp.bfloat16)
    f = jnp.dot(mblk, s, preferred_element_type=jnp.float32)      # (2H, 2B*Wfp)

    re = f[:h, :]
    im = f[h:, :]
    mag = jnp.sqrt(re * re + im * im)                             # (H, 2B*Wfp)

    half = n_planes * wfp
    acc_ref[...] += jnp.abs(mag[:, :half] - mag[:, half:])        # (H, B*Wfp)

    @pl.when(i == pl.num_programs(1) - 1)
    def _():
        total = jnp.sum(acc_ref[...]) * inv_total                 # one reduce
        out_ref[...] = jnp.zeros_like(out_ref) + total            # lane-dense


def _dft_basis(H, W, Wfp):
    """Real-valued DFT bases. Columns beyond Wf are zero (lane padding)."""
    Wf = W // 2 + 1
    k = np.arange(H)[:, None]
    m = np.arange(H)[None, :]
    ang_h = 2.0 * np.pi * k * m / H
    Ar = np.cos(ang_h)
    Ai = -np.sin(ang_h)
    mblk = np.block([[Ar, -Ai], [Ai, Ar]]).astype(np.float32)     # (2H, 2H)

    n = np.arange(W)[:, None]
    l = np.arange(Wf)[None, :]
    ang_w = 2.0 * np.pi * n * l / W
    cr = np.zeros((W, Wfp), np.float32)
    ci = np.zeros((W, Wfp), np.float32)
    cr[:, :Wf] = np.cos(ang_w)
    ci[:, :Wf] = -np.sin(ang_w)
    cw = np.concatenate([cr, ci], axis=1)                         # (W, 2*Wfp)
    return jnp.asarray(mblk), jnp.asarray(cw)


def _choose_batch(P, H, W, Wfp, budget_bytes=16 * 1024 * 1024):
    """Plane-pairs per grid step, sized for a conservative VMEM budget
    (safe on v7x's 64 MiB; v5e/v6e simply run with the same comfortable tile)."""
    per_pair = (2 * 2 * H * W * 4            # x/y input blocks, double-buffered
                + 4 * 2 * H * 2 * Wfp * 4    # z / s / f / mag intermediates
                + H * Wfp * 4)               # accumulator share
    b = max(1, budget_bytes // per_pair)
    b = int(min(b, max(1, -(-P // _NCORES))))   # no more pairs than planes/core
    step = 8 // math.gcd(H, 8)                  # keep B*H a multiple of 8
    b = max(step, (b // step) * step)
    return b


def amp_loss(x, y, *, use_bf16=False):
    """AMPLoss forward: mean | |rfft2(x)| - |rfft2(y)| |.  x, y: (N, C, H, W)."""
    assert x.shape == y.shape and x.ndim == 4
    N, C, H, W = x.shape
    Wf = W // 2 + 1
    Wfp = _round_up(Wf, _LANES)
    P = N * C

    B = _choose_batch(P, H, W, Wfp)
    groups = -(-P // (_NCORES * B))             # inner grid length per core
    Ppad = groups * _NCORES * B

    x2d = x.reshape(P * H, W).astype(jnp.float32)
    y2d = y.reshape(P * H, W).astype(jnp.float32)
    if Ppad != P:                               # zero planes contribute exactly 0
        pad = ((0, (Ppad - P) * H), (0, 0))
        x2d = jnp.pad(x2d, pad)
        y2d = jnp.pad(y2d, pad)

    mblk, cw = _dft_basis(H, W, Wfp)
    inv_total = 1.0 / float(P * H * Wf)         # true (unpadded) element count

    kernel = functools.partial(
        _amp_loss_kernel, n_planes=B, h=H, wfp=Wfp,
        inv_total=inv_total, use_bf16=use_bf16)

    xy_spec = pl.BlockSpec((B * H, W), lambda c, i: (c * groups + i, 0))
    cw_spec = pl.BlockSpec((W, 2 * Wfp), lambda c, i: (0, 0))
    mblk_spec = pl.BlockSpec((2 * H, 2 * H), lambda c, i: (0, 0))
    out_spec = pl.BlockSpec((_OUT_SUB, _LANES), lambda c, i: (c, 0))

    partial = pl.pallas_call(
        kernel,
        out_shape=jax.ShapeDtypeStruct((_NCORES * _OUT_SUB, _LANES), jnp.float32),
        grid_spec=pltpu.PrefetchScalarGridSpec(
            num_scalar_prefetch=0,
            grid=(_NCORES, groups),
            in_specs=[xy_spec, xy_spec, cw_spec, mblk_spec],
            out_specs=out_spec,
            scratch_shapes=[pltpu.VMEM((H, B * Wfp), jnp.float32)],
        ),
        compiler_params=pltpu.CompilerParams(
            dimension_semantics=("parallel", "arbitrary"),
            vmem_limit_bytes=48 * 1024 * 1024,
        ),
    )(x2d, y2d, cw, mblk)

    # Each core's (8,128) block is filled with its partial mean; combine cores.
    return jnp.sum(partial[::_OUT_SUB, 0])


def amp_loss_ref(x, y):
    xm = jnp.abs(jnp.fft.rfft2(x.astype(jnp.float32), norm="backward"))
    ym = jnp.abs(jnp.fft.rfft2(y.astype(jnp.float32), norm="backward"))
    return jnp.mean(jnp.abs(xm - ym))


if __name__ == "__main__":
    key = jax.random.PRNGKey(0)
    kx, ky = jax.random.split(key)
    N, C, H, W = 2, 4, 16, 16
    x = jax.random.normal(kx, (N, C, H, W), dtype=jnp.float32)
    y = jax.random.normal(ky, (N, C, H, W), dtype=jnp.float32)

    loss = jax.block_until_ready(amp_loss(x, y))
    ref = jax.block_until_ready(amp_loss_ref(x, y))
    np.testing.assert_allclose(np.asarray(loss), np.asarray(ref),
                               rtol=1e-3, atol=1e-3)
    print("KERNEL_OK")
</pallas_src>

<mosaic_0001>
module attributes {stable_mosaic.version = 11 : i64} {
  func.func @_amp_loss_kernel(%arg0: i32, %arg1: i32, %arg2: memref<64x16xf32, #tpu.memory_space<vmem>>, %arg3: memref<64x16xf32, #tpu.memory_space<vmem>>, %arg4: memref<16x256xf32, #tpu.memory_space<vmem>>, %arg5: memref<32x32xf32, #tpu.memory_space<vmem>>, %arg6: memref<8x128xf32, #tpu.memory_space<vmem>>, %arg7: memref<16x512xf32, #tpu.memory_space<vmem>>) attributes {dimension_semantics = [#tpu.dimension_semantics<parallel>, #tpu.dimension_semantics<arbitrary>], iteration_bounds = array<i64: 2, 1>, scalar_prefetch = 0 : i64, scratch_operands = 1 : i64, tpu.core_type = #tpu.core_type<tc>, window_params = [{transform_indices = @transform_0, window_bounds = array<i64: 64, 16>}, {transform_indices = @transform_1, window_bounds = array<i64: 64, 16>}, {pipeline_mode = #tpu.pipeline_mode<synchronous>, transform_indices = @transform_2, window_bounds = array<i64: 16, 256>}, {pipeline_mode = #tpu.pipeline_mode<synchronous>, transform_indices = @transform_3, window_bounds = array<i64: 32, 32>}, {transform_indices = @transform_4, window_bounds = array<i64: 8, 128>}]} {
    %c0_i32 = arith.constant 0 : i32
    %0 = arith.cmpi eq, %arg1, %c0_i32 : i32
    %1 = arith.extui %0 : i1 to i32
    %c0_i32_0 = arith.constant 0 : i32
    %2 = arith.cmpi ne, %1, %c0_i32_0 : i32
    scf.if %2 {
      %cst_15 = arith.constant 0.000000e+00 : f32
      %45 = vector.broadcast %cst_15 : f32 to vector<16x512xf32>
      %c0_16 = arith.constant 0 : index
      %c0_17 = arith.constant 0 : index
      %46 = vector.load %arg7[%c0_16, %c0_17] : memref<16x512xf32, #tpu.memory_space<vmem>>, vector<16x512xf32>
      tpu.vector_store %arg7[%c0_16, %c0_17], %45 {strides = array<i32>} : memref<16x512xf32, #tpu.memory_space<vmem>>, vector<16x512xf32>,
    } else {
    }
    %c0 = arith.constant 0 : index
    %c0_1 = arith.constant 0 : index
    %3 = vector.load %arg2[%c0, %c0_1] : memref<64x16xf32, #tpu.memory_space<vmem>>, vector<64x16xf32>
    %c0_2 = arith.constant 0 : index
    %c0_3 = arith.constant 0 : index
    %4 = vector.load %arg3[%c0_2, %c0_3] : memref<64x16xf32, #tpu.memory_space<vmem>>, vector<64x16xf32>
    %5 = tpu.concatenate %3, %4 in 0 : vector<64x16xf32>, vector<64x16xf32> -> vector<128x16xf32>
    %c0_4 = arith.constant 0 : index
    %c0_5 = arith.constant 0 : index
    %6 = vector.load %arg4[%c0_4, %c0_5] : memref<16x256xf32, #tpu.memory_space<vmem>>, vector<16x256xf32>
    %cst = arith.constant dense<0.000000e+00> : vector<128x256xf32>
    %7 = tpu.matmul %5, %6, %cst {dimension_numbers = #tpu.dot_dimension_numbers<[1], [0], [0], [1], [0, 0, 1, 1], [], []>} : vector<128x16xf32>, vector<16x256xf32>, vector<128x256xf32> -> vector<128x256xf32>
    %8 = vector.extract_strided_slice %7 {offsets = [0, 0], sizes = [16, 128], strides = [1, 1]} : vector<128x256xf32> to vector<16x128xf32>
    %9 = vector.extract_strided_slice %7 {offsets = [16, 0], sizes = [16, 128], strides = [1, 1]} : vector<128x256xf32> to vector<16x128xf32>
    %10 = vector.extract_strided_slice %7 {offsets = [32, 0], sizes = [16, 128], strides = [1, 1]} : vector<128x256xf32> to vector<16x128xf32>
    %11 = vector.extract_strided_slice %7 {offsets = [48, 0], sizes = [16, 128], strides = [1, 1]} : vector<128x256xf32> to vector<16x128xf32>
    %12 = vector.extract_strided_slice %7 {offsets = [64, 0], sizes = [16, 128], strides = [1, 1]} : vector<128x256xf32> to vector<16x128xf32>
    %13 = vector.extract_strided_slice %7 {offsets = [80, 0], sizes = [16, 128], strides = [1, 1]} : vector<128x256xf32> to vector<16x128xf32>
    %14 = vector.extract_strided_slice %7 {offsets = [96, 0], sizes = [16, 128], strides = [1, 1]} : vector<128x256xf32> to vector<16x128xf32>
    %15 = vector.extract_strided_slice %7 {offsets = [112, 0], sizes = [16, 128], strides = [1, 1]} : vector<128x256xf32> to vector<16x128xf32>
    %16 = tpu.concatenate %8, %9, %10, %11, %12, %13, %14, %15 in 1 : vector<16x128xf32>, vector<16x128xf32>, vector<16x128xf32>, vector<16x128xf32>, vector<16x128xf32>, vector<16x128xf32>, vector<16x128xf32>, vector<16x128xf32> -> vector<16x1024xf32>
    %17 = vector.extract_strided_slice %7 {offsets = [0, 128], sizes = [16, 128], strides = [1, 1]} : vector<128x256xf32> to vector<16x128xf32>
    %18 = vector.extract_strided_slice %7 {offsets = [16, 128], sizes = [16, 128], strides = [1, 1]} : vector<128x256xf32> to vector<16x128xf32>
    %19 = vector.extract_strided_slice %7 {offsets = [32, 128], sizes = [16, 128], strides = [1, 1]} : vector<128x256xf32> to vector<16x128xf32>
    %20 = vector.extract_strided_slice %7 {offsets = [48, 128], sizes = [16, 128], strides = [1, 1]} : vector<128x256xf32> to vector<16x128xf32>
    %21 = vector.extract_strided_slice %7 {offsets = [64, 128], sizes = [16, 128], strides = [1, 1]} : vector<128x256xf32> to vector<16x128xf32>
    %22 = vector.extract_strided_slice %7 {offsets = [80, 128], sizes = [16, 128], strides = [1, 1]} : vector<128x256xf32> to vector<16x128xf32>
    %23 = vector.extract_strided_slice %7 {offsets = [96, 128], sizes = [16, 128], strides = [1, 1]} : vector<128x256xf32> to vector<16x128xf32>
    %24 = vector.extract_strided_slice %7 {offsets = [112, 128], sizes = [16, 128], strides = [1, 1]} : vector<128x256xf32> to vector<16x128xf32>
    %25 = tpu.concatenate %17, %18, %19, %20, %21, %22, %23, %24 in 1 : vector<16x128xf32>, vector<16x128xf32>, vector<16x128xf32>, vector<16x128xf32>, vector<16x128xf32>, vector<16x128xf32>, vector<16x128xf32>, vector<16x128xf32> -> vector<16x1024xf32>
    %26 = tpu.concatenate %16, %25 in 0 : vector<16x1024xf32>, vector<16x1024xf32> -> vector<32x1024xf32>
    %c0_6 = arith.constant 0 : index
    %c0_7 = arith.constant 0 : index
    %27 = vector.load %arg5[%c0_6, %c0_7] : memref<32x32xf32, #tpu.memory_space<vmem>>, vector<32x32xf32>
    %cst_8 = arith.constant dense<0.000000e+00> : vector<32x1024xf32>
    %28 = tpu.matmul %27, %26, %cst_8 {dimension_numbers = #tpu.dot_dimension_numbers<[1], [0], [0], [1], [0, 0, 1, 1], [], []>} : vector<32x32xf32>, vector<32x1024xf32>, vector<32x1024xf32> -> vector<32x1024xf32>
    %29 = vector.extract_strided_slice %28 {offsets = [0, 0], sizes = [16, 1024], strides = [1, 1]} : vector<32x1024xf32> to vector<16x1024xf32>
    %30 = vector.extract_strided_slice %28 {offsets = [16, 0], sizes = [16, 1024], strides = [1, 1]} : vector<32x1024xf32> to vector<16x1024xf32>
    %31 = arith.mulf %29, %29 : vector<16x1024xf32>
    %32 = arith.mulf %30, %30 : vector<16x1024xf32>
    %33 = arith.addf %31, %32 : vector<16x1024xf32>
    %34 = math.sqrt %33 : vector<16x1024xf32>
    %c0_9 = arith.constant 0 : index
    %c0_10 = arith.constant 0 : index
    %35 = vector.load %arg7[%c0_9, %c0_10] : memref<16x512xf32, #tpu.memory_space<vmem>>, vector<16x512xf32>
    %36 = vector.extract_strided_slice %34 {offsets = [0, 0], sizes = [16, 512], strides = [1, 1]} : vector<16x1024xf32> to vector<16x512xf32>
    %37 = vector.extract_strided_slice %34 {offsets = [0, 512], sizes = [16, 512], strides = [1, 1]} : vector<16x1024xf32> to vector<16x512xf32>
    %38 = arith.subf %36, %37 : vector<16x512xf32>
    %39 = math.absf %38 : vector<16x512xf32>
    %40 = arith.addf %35, %39 : vector<16x512xf32>
    %c0_11 = arith.constant 0 : index
    %c0_12 = arith.constant 0 : index
    %41 = vector.load %arg7[%c0_11, %c0_12] : memref<16x512xf32, #tpu.memory_space<vmem>>, vector<16x512xf32>
    tpu.vector_store %arg7[%c0_11, %c0_12], %40 {strides = array<i32>} : memref<16x512xf32, #tpu.memory_space<vmem>>, vector<16x512xf32>,
    %c0_i32_13 = arith.constant 0 : i32
    %42 = arith.cmpi eq, %arg1, %c0_i32_13 : i32
    %43 = arith.extui %42 : i1 to i32
    %c0_i32_14 = arith.constant 0 : i32
    %44 = arith.cmpi ne, %43, %c0_i32_14 : i32
    scf.if %44 {
      %c0_15 = arith.constant 0 : index
      %c0_16 = arith.constant 0 : index
      %45 = vector.load %arg7[%c0_15, %c0_16] : memref<16x512xf32, #tpu.memory_space<vmem>>, vector<16x512xf32>
      %46 = vector.shape_cast %45 : vector<16x512xf32> to vector<1x16x512xf32>
      %cst_17 = arith.constant dense<0.000000e+00> : vector<1xf32>
      %47 = vector.multi_reduction <add>, %46, %cst_17 [1, 2] : vector<1x16x512xf32> to vector<1xf32>
      %48 = vector.shape_cast %47 : vector<1xf32> to vector<1x1x1xf32>
      %49 = vector.extract %48[0, 0, 0] : f32 from vector<1x1x1xf32>
      %cst_18 = arith.constant 8.68055562E-4 : f32
      %50 = arith.mulf %49, %cst_18 : f32
      %cst_19 = arith.constant 0.000000e+00 : f32
      %51 = vector.broadcast %cst_19 : f32 to vector<8x128xf32>
      %52 = vector.broadcast %50 : f32 to vector<8x128xf32>
      %53 = arith.addf %51, %52 : vector<8x128xf32>
      %c0_20 = arith.constant 0 : index
      %c0_21 = arith.constant 0 : index
      %54 = vector.load %arg6[%c0_20, %c0_21] : memref<8x128xf32, #tpu.memory_space<vmem>>, vector<8x128xf32>
      tpu.vector_store %arg6[%c0_20, %c0_21], %53 {strides = array<i32>} : memref<8x128xf32, #tpu.memory_space<vmem>>, vector<8x128xf32>,
    } else {
    }
    return
  }
  func.func @transform_0(%arg0: i32, %arg1: i32) -> (i32, i32) {
    %c1_i32 = arith.constant 1 : i32
    %0 = arith.muli %arg0, %c1_i32 : i32
    %1 = arith.addi %0, %arg1 : i32
    %c0_i32 = arith.constant 0 : i32
    %c0_i32_0 = arith.constant 0 : i32
    return %1, %c0_i32 : i32, i32
  }
  func.func @transform_1(%arg0: i32, %arg1: i32) -> (i32, i32) {
    %c1_i32 = arith.constant 1 : i32
    %0 = arith.muli %arg0, %c1_i32 : i32
    %1 = arith.addi %0, %arg1 : i32
    %c0_i32 = arith.constant 0 : i32
    %c0_i32_0 = arith.constant 0 : i32
    return %1, %c0_i32 : i32, i32
  }
  func.func @transform_2(%arg0: i32, %arg1: i32) -> (i32, i32) {
    %c0_i32 = arith.constant 0 : i32
    %c0_i32_0 = arith.constant 0 : i32
    %c0_i32_1 = arith.constant 0 : i32
    return %c0_i32, %c0_i32_0 : i32, i32
  }
  func.func @transform_3(%arg0: i32, %arg1: i32) -> (i32, i32) {
    %c0_i32 = arith.constant 0 : i32
    %c0_i32_0 = arith.constant 0 : i32
    %c0_i32_1 = arith.constant 0 : i32
    return %c0_i32, %c0_i32_0 : i32, i32
  }
  func.func @transform_4(%arg0: i32, %arg1: i32) -> (i32, i32) {
    %c0_i32 = arith.constant 0 : i32
    %c0_i32_0 = arith.constant 0 : i32
    return %arg0, %c0_i32 : i32, i32
  }
}

</mosaic_0001>

<llo_original>
// kernel: tpu_custom_call.1
$region0: #{tpu_custom_call.1}
  #allocation0 [shape = 'u32[]', space=smem, size = 0x4, offset = 0x4, fixed_abs, tag = 'smem constant byte address 0x4 - core index']
  #allocation1 [shape = 'u32[144,128]{1,0:T(1,128)}', space=vmem, size = 0x12000, scoped, tag = 'internal scratch']
  #allocation2 [shape = 'f32[16,512]{1,0:T(8,128)}', space=vmem, size = 0x8000, scoped, tag = 'scratch operand']
  %s0 = inlined_call_operand.vmem [shape: f32[128,16], index: 0, kind: input, shape index: {}]
  %s1 = inlined_call_operand.vmem [shape: f32[128,16], index: 1, kind: input, shape index: {}]
  %s2 = inlined_call_operand.vmem [shape: f32[16,256], index: 2, kind: input, shape index: {}]
  %s3 = inlined_call_operand.vmem [shape: f32[32,32], index: 3, kind: input, shape index: {}]
  %s4 = inlined_call_operand.hbm [shape: f32[16,128], index: 4, kind: output, shape index: {}]
  %s5 = sld [smem:[#allocation0]]
  $region57: #{tpu_custom_call.1} parent=0
    _
  %s7 = ssub.s32 1, %s5
  %s8 = scalar_select 0, %s7, %s5
  $region1: #{tpu_custom_call.1} parent=0
    #allocation3 [shape = 'u8[8192]{0}', space=vmem, size = 0x2000, scoped, tag = 'output window, operand 0']
    #allocation4 [shape = 's32[2]{0}', space=sflag, size = 0x8, scoped, tag = 'scoped memory for tpu_custom_call.1']
    %9 = vsyncpa [#allocation4], 0
    %s10 = scalar_lea.sflag [#allocation4], 1
    %11 = vsyncpa %s10, 0
    loop: start=0, step=1, limit=4
    $region2: #{tpu_custom_call.1} parent=1 // loop_pre_header
      _
    $region3: #{tpu_custom_call.1} parent=1 // loop_header
      %s13 = sphi 0, %s17
      %p14 = scmp.ge.s32.totalorder %s13, 4
      %s20 = sphi 0, %s32
      %s21 = sphi 0, %s28
      %s22 = sphi 0, %s20
      %s23 = sphi 0, %s21
      %s24 = sphi 0, %s22
      %s25 = sphi 0, %s23
      %s37 = sphi 0, %s39
      %s40 = sphi 0, %s37
      %s41 = sphi 0, %s40
      %s57 = sphi 0, %s41
      %s65 = sphi 0, %s67
      %s68 = sphi 0, %s65
      %s69 = sphi 0, %s68
      %s85 = sphi 0, %s69
      %s89 = sphi 0, %s89
      %s91 = sphi 0, %s89
      %s92 = sphi 0, %s91
      %s106 = sphi 0, %s92
      %s110 = sphi 0, %s110
      %s112 = sphi 0, %s110
      %s113 = sphi 0, %s112
      %s127 = sphi 0, %s113
      %s133 = sphi 0, %s135
      %s136 = sphi 0, %s133
      %s137 = sphi 0, %s136
      %s153 = sphi 0, %s137
    $region4: #{tpu_custom_call.1} parent=1 // loop_header_branch
      %16 = sbr.rel (%p14) target = $region8
    $region5: #{tpu_custom_call.1} parent=1 // loop_body
      %s18 = ssub.s32 %s13, 1
      %s19 = ssub.s32 %s13, 2
      %s26 = sadd.s32 1, %s21
      %p27 = scmp.ge.s32.totalorder %s26, 1
      %s28 = scalar_select %p27, 0, %s26
      %s29 = sadd.s32 1, %s20
      %s30 = scalar_select %p27, %s29, %s20
      %p31 = scmp.ge.s32.totalorder %s30, 2
      %s32 = scalar_select %p31, 0, %s30
      %s33 = sadd.s32 %s20, %s21
      %s34 = sadd.s32 %s32, %s28
      %s35 = ssub.s32 %s33, %s34
      %p36 = scmp.eq.s32.totalorder %s35, 0
      %s38 = sadd.s32 %s37, 1
      %s39 = scalar_select %p36, %s37, %s38
      %p42 = pneg %p36
      %p43 = scmp.eq.s32.totalorder %s13, 1
      %p44 = por %p42, %p43
      %p45 = scmp.ne.s32.totalorder %s37, %s40
      %p46 = scmp.eq.s32.totalorder %s13, 0
      %p47 = por %p45, %p46
      %p48 = scmp.ne.s32.totalorder %s37, %s40
      %p49 = scmp.eq.s32.totalorder %s18, 1
      %p50 = por %p48, %p49
      %p51 = scmp.ne.s32.totalorder %s40, %s41
      %p52 = scmp.eq.s32.totalorder %s18, 0
      %p53 = por %p51, %p52
      %p54 = scmp.ne.s32.totalorder %s40, %s41
      %p55 = scmp.eq.s32.totalorder %s19, 1
      %p56 = por %p54, %p55
      %p58 = scmp.ne.s32.totalorder %s41, %s57
      %p59 = scmp.eq.s32.totalorder %s19, 0
      %p60 = por %p58, %p59
      %s61 = sadd.s32 %s20, %s21
      %s62 = sadd.s32 %s32, %s28
      %s63 = ssub.s32 %s61, %s62
      %p64 = scmp.eq.s32.totalorder %s63, 0
      %s66 = sadd.s32 %s65, 1
      %s67 = scalar_select %p64, %s65, %s66
      %p70 = pneg %p64
      %p71 = scmp.eq.s32.totalorder %s13, 1
      %p72 = por %p70, %p71
      %p73 = scmp.ne.s32.totalorder %s65, %s68
      %p74 = scmp.eq.s32.totalorder %s13, 0
      %p75 = por %p73, %p74
      %p76 = scmp.ne.s32.totalorder %s65, %s68
      %p77 = scmp.eq.s32.totalorder %s18, 1
      %p78 = por %p76, %p77
      %p79 = scmp.ne.s32.totalorder %s68, %s69
      %p80 = scmp.eq.s32.totalorder %s18, 0
      %p81 = por %p79, %p80
      %p82 = scmp.ne.s32.totalorder %s68, %s69
      %p83 = scmp.eq.s32.totalorder %s19, 1
      %p84 = por %p82, %p83
      %p86 = scmp.ne.s32.totalorder %s69, %s85
      %p87 = scmp.eq.s32.totalorder %s19, 0
      %p88 = por %p86, %p87
      %s90 = sadd.s32 %s89, 1
      %p93 = scmp.eq.s32.totalorder %s13, 1
      %p94 = scmp.ne.s32.totalorder %s89, %s91
      %p95 = scmp.eq.s32.totalorder %s13, 0
      %p96 = por %p94, %p95
      %p97 = scmp.ne.s32.totalorder %s89, %s91
      %p98 = scmp.eq.s32.totalorder %s18, 1
      %p99 = por %p97, %p98
      %p100 = scmp.ne.s32.totalorder %s91, %s92
      %p101 = scmp.eq.s32.totalorder %s18, 0
      %p102 = por %p100, %p101
      %p103 = scmp.ne.s32.totalorder %s91, %s92
      %p104 = scmp.eq.s32.totalorder %s19, 1
      %p105 = por %p103, %p104
      %p107 = scmp.ne.s32.totalorder %s92, %s106
      %p108 = scmp.eq.s32.totalorder %s19, 0
      %p109 = por %p107, %p108
      %s111 = sadd.s32 %s110, 1
      %p114 = scmp.eq.s32.totalorder %s13, 1
      %p115 = scmp.ne.s32.totalorder %s110, %s112
      %p116 = scmp.eq.s32.totalorder %s13, 0
      %p117 = por %p115, %p116
      %p118 = scmp.ne.s32.totalorder %s110, %s112
      %p119 = scmp.eq.s32.totalorder %s18, 1
      %p120 = por %p118, %p119
      %p121 = scmp.ne.s32.totalorder %s112, %s113
      %p122 = scmp.eq.s32.totalorder %s18, 0
      %p123 = por %p121, %p122
      %p124 = scmp.ne.s32.totalorder %s112, %s113
      %p125 = scmp.eq.s32.totalorder %s19, 1
      %p126 = por %p124, %p125
      %p128 = scmp.ne.s32.totalorder %s113, %s127
      %p129 = scmp.eq.s32.totalorder %s19, 0
      %p130 = por %p128, %p129
      %s131 = ssub.s32 %s20, %s32
      %p132 = scmp.eq.s32.totalorder %s131, 0
      %s134 = sadd.s32 %s133, 1
      %s135 = scalar_select %p132, %s133, %s134
      %p138 = pneg %p132
      %p139 = scmp.eq.s32.totalorder %s13, 1
      %p140 = por %p138, %p139
      %p141 = scmp.ne.s32.totalorder %s133, %s136
      %p142 = scmp.eq.s32.totalorder %s13, 0
      %p143 = por %p141, %p142
      %p144 = scmp.ne.s32.totalorder %s133, %s136
      %p145 = scmp.eq.s32.totalorder %s18, 1
      %p146 = por %p144, %p145
      %p147 = scmp.ne.s32.totalorder %s136, %s137
      %p148 = scmp.eq.s32.totalorder %s18, 0
      %p149 = por %p147, %p148
      %p150 = scmp.ne.s32.totalorder %s136, %s137
      %p151 = scmp.eq.s32.totalorder %s19, 1
      %p152 = por %p150, %p151
      %p154 = scmp.ne.s32.totalorder %s137, %s153
      %p155 = scmp.eq.s32.totalorder %s19, 0
      %p156 = por %p154, %p155
      %p157 = scmp.le.s32.totalorder 1, %s13
      %p158 = scmp.lt.s32.totalorder %s13, 3
      %p159 = pnand %p157, %p158
      %p160 = pneg %p159
      // Predicated region
      $region9: #{tpu_custom_call.1} parent=5 // pred_check
        _
      $region10: #{tpu_custom_call.1} parent=5 // pred_check_branch
        %162 = sbr.rel (%p159) target = $region12
      $region11: #{tpu_custom_call.1} parent=5 // pred_region
        %s163 = ssub.s32 %s13, 1
        // Predicated region
        $region13: #{tpu_custom_call.1} parent=11 // pred_check
          %p164 = pneg %p102
        $region14: #{tpu_custom_call.1} parent=11 // pred_check_branch
          %166 = sbr.rel (%p164) target = $region16
        $region15: #{tpu_custom_call.1} parent=11 // pred_region
          _
        $region16: #{tpu_custom_call.1} parent=11 // pred_fallthru
          _
        // Predicated region
        $region17: #{tpu_custom_call.1} parent=11 // pred_check
          %p167 = pneg %p123
        $region18: #{tpu_custom_call.1} parent=11 // pred_check_branch
          %169 = sbr.rel (%p167) target = $region20
        $region19: #{tpu_custom_call.1} parent=11 // pred_region
          _
        $region20: #{tpu_custom_call.1} parent=11 // pred_fallthru
          _
      $region12: #{tpu_custom_call.1} parent=5 // pred_fallthru
        _
      %p170 = scmp.lt.s32.totalorder %s13, 2
      // Predicated region
      $region21: #{tpu_custom_call.1} parent=5 // pred_check
        %p171 = pneg %p170
      $region22: #{tpu_custom_call.1} parent=5 // pred_check_branch
        %173 = sbr.rel (%p171) target = $region24
      $region23: #{tpu_custom_call.1} parent=5 // pred_region
        // Predicated region
        $region25: #{tpu_custom_call.1} parent=23 // pred_check
          %p174 = pneg %p47
        $region26: #{tpu_custom_call.1} parent=23 // pred_check_branch
          %176 = sbr.rel (%p174) target = $region28
        $region27: #{tpu_custom_call.1} parent=23 // pred_region
          %s177 = sadd.s32 %s20, %s21
          %s178 = smul.u32 8, %s177
          %p179 = scmp.lt.s32.totalorder %s178, 15
          %s180 = scalar_select %p179, %s178, 15
          %s181 = smul.addr %s180, 8
          %s182 = scalar_lea.vmem %s0, %s181
          %s183 = sadd.s32 %s20, %s21
          %s184 = smul.u32 8, %s183
        $region28: #{tpu_custom_call.1} parent=23 // pred_fallthru
          _
        // Predicated region
        $region29: #{tpu_custom_call.1} parent=23 // pred_check
          %p185 = pneg %p75
        $region30: #{tpu_custom_call.1} parent=23 // pred_check_branch
          %187 = sbr.rel (%p185) target = $region32
        $region31: #{tpu_custom_call.1} parent=23 // pred_region
          %s188 = sadd.s32 %s20, %s21
          %s189 = smul.u32 8, %s188
          %p190 = scmp.lt.s32.totalorder %s189, 15
          %s191 = scalar_select %p190, %s189, 15
          %s192 = smul.addr %s191, 8
          %s193 = scalar_lea.vmem %s1, %s192
          %s194 = sadd.s32 %s20, %s21
          %s195 = smul.u32 8, %s194
        $region32: #{tpu_custom_call.1} parent=23 // pred_fallthru
          _
      $region24: #{tpu_custom_call.1} parent=5 // pred_fallthru
        _
      %p196 = scmp.le.s32.totalorder 1, %s13
      %p197 = scmp.lt.s32.totalorder %s13, 3
      %p198 = pnand %p196, %p197
      %p199 = pneg %p198
      // Predicated region
      $region33: #{tpu_custom_call.1} parent=5 // pred_check
        _
      $region34: #{tpu_custom_call.1} parent=5 // pred_check_branch
        %201 = sbr.rel (%p198) target = $region36
      $region35: #{tpu_custom_call.1} parent=5 // pred_region
        %s202 = ssub.s32 %s13, 1
        %s203 = sadd.s32 %s22, %s23
        %s204 = smul.u32 8, %s203
        %p205 = scmp.lt.s32.totalorder %s204, 15
        %s206 = scalar_select %p205, %s204, 15
        %s207 = smul.addr %s206, 8
        %s208 = scalar_lea.vmem %s0, %s207
        %p209 = pneg %p53
        %p210 = pneg %p50
        %s211 = sadd.s32 %s22, %s23
        %s212 = smul.u32 8, %s211
        %p213 = scmp.lt.s32.totalorder %s212, 15
        %s214 = scalar_select %p213, %s212, 15
        %s215 = smul.addr %s214, 8
        %s216 = scalar_lea.vmem %s1, %s215
        %p217 = pneg %p81
        %p218 = pneg %p78
        %p219 = pneg %p102
        %p220 = pneg %p99
        %p221 = pneg %p123
        %p222 = pneg %p120
        %p223 = pneg %p149
        %p224 = pneg %p146
        %s225 = sand.u32 %s136, 1
        %s226 = scalar_lea.sflag [#allocation4], %s225
        %s227 = sand.u32 %s136, 1
        %s228 = smul.addr %s227, 8
        %s229 = scalar_lea.vmem [#allocation3], %s228
        %s230 = sadd.s32 %s22, %s23
        %s231 = smul.u32 8, %s230
        %p232 = scmp.lt.s32.totalorder %s231, 15
        %s233 = scalar_select %p232, %s231, 15
        %s234 = smul.addr %s233, 8
        %s235 = scalar_lea.vmem %s0, %s234
        %s236 = sadd.s32 %s22, %s23
        %s237 = smul.u32 8, %s236
        %s238 = sadd.s32 %s22, %s23
        %s239 = smul.u32 8, %s238
        %p240 = scmp.lt.s32.totalorder %s239, 15
        %s241 = scalar_select %p240, %s239, 15
        %s242 = smul.addr %s241, 8
        %s243 = scalar_lea.vmem %s1, %s242
        %s244 = sadd.s32 %s22, %s23
        %s245 = smul.u32 8, %s244
        %p246 = scmp.eq.s32.totalorder %s23, 0
        // Predicated region
        $region37: #{tpu_custom_call.1} parent=35 // pred_check
          %p247 = pneg %p246
        $region38: #{tpu_custom_call.1} parent=35 // pred_check_branch
          %249 = sbr.rel (%p247) target = $region40
        $region39: #{tpu_custom_call.1} parent=35 // pred_region
          %250 = vst [vmem:[#allocation2] sm:$0xff] 0.0
          %251 = vst [vmem:[#allocation2 + $0x8] sm:$0xff] 0.0
          %252 = vst [vmem:[#allocation2 + $0x10] sm:$0xff] 0.0
          %253 = vst [vmem:[#allocation2 + $0x18] sm:$0xff] 0.0
          %254 = vst [vmem:[#allocation2 + $0x20] sm:$0xff] 0.0
          %255 = vst [vmem:[#allocation2 + $0x28] sm:$0xff] 0.0
          %256 = vst [vmem:[#allocation2 + $0x30] sm:$0xff] 0.0
          %257 = vst [vmem:[#allocation2 + $0x38] sm:$0xff] 0.0
        $region40: #{tpu_custom_call.1} parent=35 // pred_fallthru
          _
        %v258 = vld [vmem:[%s235] sm:$0xff]
        %v259 = vld [vmem:[%s235 + $0x8] sm:$0xff]
        %v260 = vld [vmem:[%s235 + $0x10] sm:$0xff]
        %v261 = vld [vmem:[%s235 + $0x18] sm:$0xff]
        %v262 = vld [vmem:[%s235 + $0x20] sm:$0xff]
        %v263 = vld [vmem:[%s235 + $0x28] sm:$0xff]
        %v264 = vld [vmem:[%s235 + $0x30] sm:$0xff]
        %v265 = vld [vmem:[%s235 + $0x38] sm:$0xff]
        %v266 = vld [vmem:[%s243] sm:$0xff]
        %v267 = vld [vmem:[%s243 + $0x8] sm:$0xff]
        %v268 = vld [vmem:[%s243 + $0x10] sm:$0xff]
        %v269 = vld [vmem:[%s243 + $0x18] sm:$0xff]
        %v270 = vld [vmem:[%s243 + $0x20] sm:$0xff]
        %v271 = vld [vmem:[%s243 + $0x28] sm:$0xff]
        %v272 = vld [vmem:[%s243 + $0x30] sm:$0xff]
        %v273 = vld [vmem:[%s243 + $0x38] sm:$0xff]
        %v274 = vld [vmem:[%s2] sm:$0xff]
        %v275 = vld [vmem:[%s2 + $0x8] sm:$0xff]
        %v276 = vld [vmem:[%s2 + $0x10] sm:$0xff]
        %v277 = vld [vmem:[%s2 + $0x18] sm:$0xff]
        %vm278 = vcmask 130048
        %v280 = vsel %vm278, %v258, 0
        %v283 = vsel %vm278, %v259, 0
        %v286 = vsel %vm278, %v260, 0
        %v289 = vsel %vm278, %v261, 0
        %v292 = vsel %vm278, %v262, 0
        %v295 = vsel %vm278, %v263, 0
        %v298 = vsel %vm278, %v264, 0
        %v301 = vsel %vm278, %v265, 0
        %v304 = vsel %vm278, %v266, 0
        %v307 = vsel %vm278, %v267, 0
        %v310 = vsel %vm278, %v268, 0
        %v313 = vsel %vm278, %v269, 0
        %v316 = vsel %vm278, %v270, 0
        %v319 = vsel %vm278, %v271, 0
        %v322 = vsel %vm278, %v272, 0
        %v325 = vsel %vm278, %v273, 0
        %327 = vmatprep.subr.mxu0 0.0
        %328 = vmatpush1.msra.mxu0 0.0
        %329 = vmatprep.subr.mxu0 0.0
        %330 = vmatpush1.msra.mxu0 0.0
        %331 = vmatprep.subr.mxu0 0.0
        %332 = vmatpush1.msra.mxu0 0.0
        %333 = vmatprep.subr.mxu0 0.0
        %334 = vmatpush1.msra.mxu0 0.0
        %335 = vmatprep.subr.mxu0 0.0
        %336 = vmatpush1.msra.mxu0 0.0
        %337 = vmatprep.subr.mxu0 0.0
        %338 = vmatpush1.msra.mxu0 0.0
        %339 = vmatprep.subr.mxu0 0.0
        %340 = vmatpush1.msra.mxu0 0.0
        %341 = vmatprep.subr.mxu0 0.0
        %342 = vmatpush1.msra.mxu0 0.0
        %343 = vmatprep.subr.mxu0 0.0
        %344 = vmatpush1.msra.mxu0 0.0
        %345 = vmatprep.subr.mxu0 0.0
        %346 = vmatpush1.msra.mxu0 0.0
        %347 = vmatprep.subr.mxu0 0.0
        %348 = vmatpush1.msra.mxu0 0.0
        %349 = vmatprep.subr.mxu0 0.0
        %350 = vmatpush1.msra.mxu0 0.0
        %351 = vmatprep.subr.mxu0 0.0
        %352 = vmatpush1.msra.mxu0 0.0
        %353 = vmatprep.subr.mxu0 0.0
        %354 = vmatpush1.msra.mxu0 0.0
        %355 = vmatprep.subr.mxu0 %v277
        %356 = vmatpush1.msra.mxu0 %v276
        %357 = vmatprep.subr.mxu0 %v275
        %358 = vmatpush1.msra.mxu0 %v274
        %359 = vmatprep.subr.mxu0 0.0
        %360 = vmatpush2.msra.mxu0 0.0
        %361 = vmatprep.subr.mxu0 0.0
        %362 = vmatpush2.msra.mxu0 0.0
        %363 = vmatprep.subr.mxu0 0.0
        %364 = vmatpush2.msra.mxu0 0.0
        %365 = vmatprep.subr.mxu0 0.0
        %366 = vmatpush2.msra.mxu0 0.0
        %367 = vmatprep.subr.mxu0 0.0
        %368 = vmatpush2.msra.mxu0 0.0
        %369 = vmatprep.subr.mxu0 0.0
        %370 = vmatpush2.msra.mxu0 0.0
        %371 = vmatprep.subr.mxu0 0.0
        %372 = vmatpush2.msra.mxu0 0.0
        %373 = vmatprep.subr.mxu0 0.0
        %374 = vmatpush2.msra.mxu0 0.0
        %375 = vmatprep.subr.mxu0 0.0
        %376 = vmatpush2.msra.mxu0 0.0
        %377 = vmatprep.subr.mxu0 0.0
        %378 = vmatpush2.msra.mxu0 0.0
        %379 = vmatprep.subr.mxu0 0.0
        %380 = vmatpush2.msra.mxu0 0.0
        %381 = vmatprep.subr.mxu0 0.0
        %382 = vmatpush2.msra.mxu0 0.0
        %383 = vmatprep.subr.mxu0 0.0
        %384 = vmatpush2.msra.mxu0 0.0
        %385 = vmatprep.subr.mxu0 0.0
        %386 = vmatpush2.msra.mxu0 0.0
        %387 = vmatprep.subr.mxu0 0.0
        %388 = vmatpush2.msra.mxu0 0.0
        %389 = vmatprep.subr.mxu0 0.0
        %390 = vmatpush2.msra.mxu0 0.0
        %391 = vmatprep.mubr.f32.mxu0 0.0
        %392 = vmatmul.mubr.f32.gmra.mxu0 %v280
        %v393 = vpop.f32.mrf.mxu0
        %v394 = vadd.f32 0.0, %v393
        %v395 = vpop.f32.mrf.mxu0
        %v396 = vadd.f32 0.0, %v395
        %397 = vmatprep.mubr.f32.mxu0 0.0
        %398 = vmatmul.mubr.f32.gmra.mxu0 %v283
        %v399 = vpop.f32.mrf.mxu0
        %v400 = vadd.f32 0.0, %v399
        %v401 = vpop.f32.mrf.mxu0
        %v402 = vadd.f32 0.0, %v401
        %403 = vmatprep.mubr.f32.mxu0 0.0
        %404 = vmatmul.mubr.f32.gmra.mxu0 %v286
        %v405 = vpop.f32.mrf.mxu0
        %v406 = vadd.f32 0.0, %v405
        %v407 = vpop.f32.mrf.mxu0
        %v408 = vadd.f32 0.0, %v407
        %409 = vmatprep.mubr.f32.mxu0 0.0
        %410 = vmatmul.mubr.f32.gmra.mxu0 %v289
        %v411 = vpop.f32.mrf.mxu0
        %v412 = vadd.f32 0.0, %v411
        %v413 = vpop.f32.mrf.mxu0
        %v414 = vadd.f32 0.0, %v413
        %415 = vmatprep.mubr.f32.mxu0 0.0
        %416 = vmatmul.mubr.f32.gmra.mxu0 %v292
        %v417 = vpop.f32.mrf.mxu0
        %v418 = vadd.f32 0.0, %v417
        %v419 = vpop.f32.mrf.mxu0
        %v420 = vadd.f32 0.0, %v419
        %421 = vmatprep.mubr.f32.mxu0 0.0
        %422 = vmatmul.mubr.f32.gmra.mxu0 %v295
        %v423 = vpop.f32.mrf.mxu0
        %v424 = vadd.f32 0.0, %v423
        %v425 = vpop.f32.mrf.mxu0
        %v426 = vadd.f32 0.0, %v425
        %427 = vmatprep.mubr.f32.mxu0 0.0
        %428 = vmatmul.mubr.f32.gmra.mxu0 %v298
        %v429 = vpop.f32.mrf.mxu0
        %v430 = vadd.f32 0.0, %v429
        %v431 = vpop.f32.mrf.mxu0
        %v432 = vadd.f32 0.0, %v431
        %433 = vmatprep.mubr.f32.mxu0 0.0
        %434 = vmatmul.mubr.f32.gmra.mxu0 %v301
        %v435 = vpop.f32.mrf.mxu0
        %v436 = vadd.f32 0.0, %v435
        %v437 = vpop.f32.mrf.mxu0
        %v438 = vadd.f32 0.0, %v437
        %439 = vmatprep.mubr.f32.mxu0 0.0
        %440 = vmatmul.mubr.f32.gmra.mxu0 %v304
        %v441 = vpop.f32.mrf.mxu0
        %v442 = vadd.f32 0.0, %v441
        %v443 = vpop.f32.mrf.mxu0
        %v444 = vadd.f32 0.0, %v443
        %445 = vmatprep.mubr.f32.mxu0 0.0
        %446 = vmatmul.mubr.f32.gmra.mxu0 %v307
        %v447 = vpop.f32.mrf.mxu0
        %v448 = vadd.f32 0.0, %v447
        %v449 = vpop.f32.mrf.mxu0
        %v450 = vadd.f32 0.0, %v449
        %451 = vmatprep.mubr.f32.mxu0 0.0
        %452 = vmatmul.mubr.f32.gmra.mxu0 %v310
        %v453 = vpop.f32.mrf.mxu0
        %v454 = vadd.f32 0.0, %v453
        %v455 = vpop.f32.mrf.mxu0
        %v456 = vadd.f32 0.0, %v455
        %457 = vmatprep.mubr.f32.mxu0 0.0
        %458 = vmatmul.mubr.f32.gmra.mxu0 %v313
        %v459 = vpop.f32.mrf.mxu0
        %v460 = vadd.f32 0.0, %v459
        %v461 = vpop.f32.mrf.mxu0
        %v462 = vadd.f32 0.0, %v461
        %463 = vmatprep.mubr.f32.mxu0 0.0
        %464 = vmatmul.mubr.f32.gmra.mxu0 %v316
        %v465 = vpop.f32.mrf.mxu0
        %v466 = vadd.f32 0.0, %v465
        %v467 = vpop.f32.mrf.mxu0
        %v468 = vadd.f32 0.0, %v467
        %469 = vmatprep.mubr.f32.mxu0 0.0
        %470 = vmatmul.mubr.f32.gmra.mxu0 %v319
        %v471 = vpop.f32.mrf.mxu0
        %v472 = vadd.f32 0.0, %v471
        %v473 = vpop.f32.mrf.mxu0
        %v474 = vadd.f32 0.0, %v473
        %475 = vmatprep.mubr.f32.mxu0 0.0
        %476 = vmatmul.mubr.f32.gmra.mxu0 %v322
        %v477 = vpop.f32.mrf.mxu0
        %v478 = vadd.f32 0.0, %v477
        %v479 = vpop.f32.mrf.mxu0
        %v480 = vadd.f32 0.0, %v479
        %481 = vmatprep.mubr.f32.mxu0 0.0
        %482 = vmatmul.mubr.f32.gmra.mxu0 %v325
        %v483 = vpop.f32.mrf.mxu0
        %v484 = vadd.f32 0.0, %v483
        %v485 = vpop.f32.mrf.mxu0
        %v486 = vadd.f32 0.0, %v485
        %487 = vdwg.mxu0
        %v488 = vld [vmem:[%s3] sm:$0xff]
        %v489 = vld [vmem:[%s3 + $0x8] sm:$0xff]
        %v490 = vld [vmem:[%s3 + $0x10] sm:$0xff]
        %v491 = vld [vmem:[%s3 + $0x18] sm:$0xff]
        %vm492 = vcmask 261120
        %v494 = vsel %vm492, %v488, 0
        %v497 = vsel %vm492, %v489, 0
        %v500 = vsel %vm492, %v490, 0
        %v503 = vsel %vm492, %v491, 0
        %505 = vmatprep.subr.mxu0 0.0
        %506 = vmatpush1.msra.mxu0 0.0
        %507 = vmatprep.subr.mxu0 0.0
        %508 = vmatpush1.msra.mxu0 0.0
        %509 = vmatprep.subr.mxu0 0.0
        %510 = vmatpush1.msra.mxu0 0.0
        %511 = vmatprep.subr.mxu0 0.0
        %512 = vmatpush1.msra.mxu0 0.0
        %513 = vmatprep.subr.mxu0 0.0
        %514 = vmatpush1.msra.mxu0 0.0
        %515 = vmatprep.subr.mxu0 0.0
        %516 = vmatpush1.msra.mxu0 0.0
        %517 = vmatprep.subr.mxu0 0.0
        %518 = vmatpush1.msra.mxu0 0.0
        %519 = vmatprep.subr.mxu0 0.0
        %520 = vmatpush1.msra.mxu0 0.0
        %521 = vmatprep.subr.mxu0 0.0
        %522 = vmatpush1.msra.mxu0 0.0
        %523 = vmatprep.subr.mxu0 0.0
        %524 = vmatpush1.msra.mxu0 0.0
        %525 = vmatprep.subr.mxu0 0.0
        %526 = vmatpush1.msra.mxu0 0.0
        %527 = vmatprep.subr.mxu0 0.0
        %528 = vmatpush1.msra.mxu0 0.0
        %529 = vmatprep.subr.mxu0 %v414
        %530 = vmatpush1.msra.mxu0 %v402
        %531 = vmatprep.subr.mxu0 %v408
        %532 = vmatpush1.msra.mxu0 %v396
        %533 = vmatprep.subr.mxu0 %v412
        %534 = vmatpush1.msra.mxu0 %v400
        %535 = vmatprep.subr.mxu0 %v406
        %536 = vmatpush1.msra.mxu0 %v394
        %537 = vmatprep.subr.mxu0 0.0
        %538 = vmatpush2.msra.mxu0 0.0
        %539 = vmatprep.subr.mxu0 0.0
        %540 = vmatpush2.msra.mxu0 0.0
        %541 = vmatprep.subr.mxu0 0.0
        %542 = vmatpush2.msra.mxu0 0.0
        %543 = vmatprep.subr.mxu0 0.0
        %544 = vmatpush2.msra.mxu0 0.0
        %545 = vmatprep.subr.mxu0 0.0
        %546 = vmatpush2.msra.mxu0 0.0
        %547 = vmatprep.subr.mxu0 0.0
        %548 = vmatpush2.msra.mxu0 0.0
        %549 = vmatprep.subr.mxu0 0.0
        %550 = vmatpush2.msra.mxu0 0.0
        %551 = vmatprep.subr.mxu0 0.0
        %552 = vmatpush2.msra.mxu0 0.0
        %553 = vmatprep.subr.mxu0 0.0
        %554 = vmatpush2.msra.mxu0 0.0
        %555 = vmatprep.subr.mxu0 0.0
        %556 = vmatpush2.msra.mxu0 0.0
        %557 = vmatprep.subr.mxu0 0.0
        %558 = vmatpush2.msra.mxu0 0.0
        %559 = vmatprep.subr.mxu0 0.0
        %560 = vmatpush2.msra.mxu0 0.0
        %561 = vmatprep.subr.mxu0 0.0
        %562 = vmatpush2.msra.mxu0 0.0
        %563 = vmatprep.subr.mxu0 0.0
        %564 = vmatpush2.msra.mxu0 0.0
        %565 = vmatprep.subr.mxu0 0.0
        %566 = vmatpush2.msra.mxu0 0.0
        %567 = vmatprep.subr.mxu0 0.0
        %568 = vmatpush2.msra.mxu0 0.0
        %569 = vmatprep.mubr.f32.mxu0 0.0
        %570 = vmatmul.mubr.f32.gmra.mxu0 %v494
        %v571 = vpop.f32.mrf.mxu0
        %v572 = vadd.f32 0.0, %v571
        %v573 = vpop.f32.mrf.mxu0
        %v574 = vadd.f32 0.0, %v573
        %575 = vmatprep.mubr.f32.mxu0 0.0
        %576 = vmatmul.mubr.f32.gmra.mxu0 %v497
        %v577 = vpop.f32.mrf.mxu0
        %v578 = vadd.f32 0.0, %v577
        %v579 = vpop.f32.mrf.mxu0
        %v580 = vadd.f32 0.0, %v579
        %581 = vmatprep.mubr.f32.mxu0 0.0
        %582 = vmatmul.mubr.f32.gmra.mxu0 %v500
        %v583 = vpop.f32.mrf.mxu0
        %v584 = vadd.f32 0.0, %v583
        %v585 = vpop.f32.mrf.mxu0
        %v586 = vadd.f32 0.0, %v585
        %587 = vmatprep.mubr.f32.mxu0 0.0
        %588 = vmatmul.mubr.f32.gmra.mxu0 %v503
        %v589 = vpop.f32.mrf.mxu0
        %v590 = vadd.f32 0.0, %v589
        %v591 = vpop.f32.mrf.mxu0
        %v592 = vadd.f32 0.0, %v591
        %593 = vdwg.mxu0
        %594 = vmatprep.subr.mxu0 0.0
        %595 = vmatpush1.msra.mxu0 0.0
        %596 = vmatprep.subr.mxu0 0.0
        %597 = vmatpush1.msra.mxu0 0.0
        %598 = vmatprep.subr.mxu0 0.0
        %599 = vmatpush1.msra.mxu0 0.0
        %600 = vmatprep.subr.mxu0 0.0
        %601 = vmatpush1.msra.mxu0 0.0
        %602 = vmatprep.subr.mxu0 0.0
        %603 = vmatpush1.msra.mxu0 0.0
        %604 = vmatprep.subr.mxu0 0.0
        %605 = vmatpush1.msra.mxu0 0.0
        %606 = vmatprep.subr.mxu0 0.0
        %607 = vmatpush1.msra.mxu0 0.0
        %608 = vmatprep.subr.mxu0 0.0
        %609 = vmatpush1.msra.mxu0 0.0
        %610 = vmatprep.subr.mxu0 0.0
        %611 = vmatpush1.msra.mxu0 0.0
        %612 = vmatprep.subr.mxu0 0.0
        %613 = vmatpush1.msra.mxu0 0.0
        %614 = vmatprep.subr.mxu0 0.0
        %615 = vmatpush1.msra.mxu0 0.0
        %616 = vmatprep.subr.mxu0 0.0
        %617 = vmatpush1.msra.mxu0 0.0
        %618 = vmatprep.subr.mxu0 %v438
        %619 = vmatpush1.msra.mxu0 %v426
        %620 = vmatprep.subr.mxu0 %v432
        %621 = vmatpush1.msra.mxu0 %v420
        %622 = vmatprep.subr.mxu0 %v436
        %623 = vmatpush1.msra.mxu0 %v424
        %624 = vmatprep.subr.mxu0 %v430
        %625 = vmatpush1.msra.mxu0 %v418
        %626 = vmatprep.subr.mxu0 0.0
        %627 = vmatpush2.msra.mxu0 0.0
        %628 = vmatprep.subr.mxu0 0.0
        %629 = vmatpush2.msra.mxu0 0.0
        %630 = vmatprep.subr.mxu0 0.0
        %631 = vmatpush2.msra.mxu0 0.0
        %632 = vmatprep.subr.mxu0 0.0
        %633 = vmatpush2.msra.mxu0 0.0
        %634 = vmatprep.subr.mxu0 0.0
        %635 = vmatpush2.msra.mxu0 0.0
        %636 = vmatprep.subr.mxu0 0.0
        %637 = vmatpush2.msra.mxu0 0.0
        %638 = vmatprep.subr.mxu0 0.0
        %639 = vmatpush2.msra.mxu0 0.0
        %640 = vmatprep.subr.mxu0 0.0
        %641 = vmatpush2.msra.mxu0 0.0
        %642 = vmatprep.subr.mxu0 0.0
        %643 = vmatpush2.msra.mxu0 0.0
        %644 = vmatprep.subr.mxu0 0.0
        %645 = vmatpush2.msra.mxu0 0.0
        %646 = vmatprep.subr.mxu0 0.0
        %647 = vmatpush2.msra.mxu0 0.0
        %648 = vmatprep.subr.mxu0 0.0
        %649 = vmatpush2.msra.mxu0 0.0
        %650 = vmatprep.subr.mxu0 0.0
        %651 = vmatpush2.msra.mxu0 0.0
        %652 = vmatprep.subr.mxu0 0.0
        %653 = vmatpush2.msra.mxu0 0.0
        %654 = vmatprep.subr.mxu0 0.0
        %655 = vmatpush2.msra.mxu0 0.0
        %656 = vmatprep.subr.mxu0 0.0
        %657 = vmatpush2.msra.mxu0 0.0
        %658 = vmatprep.mubr.f32.mxu0 0.0
        %659 = vmatmul.mubr.f32.gmra.mxu0 %v494
        %v660 = vpop.f32.mrf.mxu0
        %v661 = vadd.f32 0.0, %v660
        %v662 = vpop.f32.mrf.mxu0
        %v663 = vadd.f32 0.0, %v662
        %664 = vmatprep.mubr.f32.mxu0 0.0
        %665 = vmatmul.mubr.f32.gmra.mxu0 %v497
        %v666 = vpop.f32.mrf.mxu0
        %v667 = vadd.f32 0.0, %v666
        %v668 = vpop.f32.mrf.mxu0
        %v669 = vadd.f32 0.0, %v668
        %670 = vmatprep.mubr.f32.mxu0 0.0
        %671 = vmatmul.mubr.f32.gmra.mxu0 %v500
        %v672 = vpop.f32.mrf.mxu0
        %v673 = vadd.f32 0.0, %v672
        %v674 = vpop.f32.mrf.mxu0
        %v675 = vadd.f32 0.0, %v674
        %676 = vmatprep.mubr.f32.mxu0 0.0
        %677 = vmatmul.mubr.f32.gmra.mxu0 %v503
        %v678 = vpop.f32.mrf.mxu0
        %v679 = vadd.f32 0.0, %v678
        %v680 = vpop.f32.mrf.mxu0
        %v681 = vadd.f32 0.0, %v680
        %682 = vdwg.mxu0
        %683 = vmatprep.subr.mxu0 0.0
        %684 = vmatpush1.msra.mxu0 0.0
        %685 = vmatprep.subr.mxu0 0.0
        %686 = vmatpush1.msra.mxu0 0.0
        %687 = vmatprep.subr.mxu0 0.0
        %688 = vmatpush1.msra.mxu0 0.0
        %689 = vmatprep.subr.mxu0 0.0
        %690 = vmatpush1.msra.mxu0 0.0
        %691 = vmatprep.subr.mxu0 0.0
        %692 = vmatpush1.msra.mxu0 0.0
        %693 = vmatprep.subr.mxu0 0.0
        %694 = vmatpush1.msra.mxu0 0.0
        %695 = vmatprep.subr.mxu0 0.0
        %696 = vmatpush1.msra.mxu0 0.0
        %697 = vmatprep.subr.mxu0 0.0
        %698 = vmatpush1.msra.mxu0 0.0
        %699 = vmatprep.subr.mxu0 0.0
        %700 = vmatpush1.msra.mxu0 0.0
        %701 = vmatprep.subr.mxu0 0.0
        %702 = vmatpush1.msra.mxu0 0.0
        %703 = vmatprep.subr.mxu0 0.0
        %704 = vmatpush1.msra.mxu0 0.0
        %705 = vmatprep.subr.mxu0 0.0
        %706 = vmatpush1.msra.mxu0 0.0
        %707 = vmatprep.subr.mxu0 %v462
        %708 = vmatpush1.msra.mxu0 %v450
        %709 = vmatprep.subr.mxu0 %v456
        %710 = vmatpush1.msra.mxu0 %v444
        %711 = vmatprep.subr.mxu0 %v460
        %712 = vmatpush1.msra.mxu0 %v448
        %713 = vmatprep.subr.mxu0 %v454
        %714 = vmatpush1.msra.mxu0 %v442
        %715 = vmatprep.subr.mxu0 0.0
        %716 = vmatpush2.msra.mxu0 0.0
        %717 = vmatprep.subr.mxu0 0.0
        %718 = vmatpush2.msra.mxu0 0.0
        %719 = vmatprep.subr.mxu0 0.0
        %720 = vmatpush2.msra.mxu0 0.0
        %721 = vmatprep.subr.mxu0 0.0
        %722 = vmatpush2.msra.mxu0 0.0
        %723 = vmatprep.subr.mxu0 0.0
        %724 = vmatpush2.msra.mxu0 0.0
        %725 = vmatprep.subr.mxu0 0.0
        %726 = vmatpush2.msra.mxu0 0.0
        %727 = vmatprep.subr.mxu0 0.0
        %728 = vmatpush2.msra.mxu0 0.0
        %729 = vmatprep.subr.mxu0 0.0
        %730 = vmatpush2.msra.mxu0 0.0
        %731 = vmatprep.subr.mxu0 0.0
        %732 = vmatpush2.msra.mxu0 0.0
        %733 = vmatprep.subr.mxu0 0.0
        %734 = vmatpush2.msra.mxu0 0.0
        %735 = vmatprep.subr.mxu0 0.0
        %736 = vmatpush2.msra.mxu0 0.0
        %737 = vmatprep.subr.mxu0 0.0
        %738 = vmatpush2.msra.mxu0 0.0
        %739 = vmatprep.subr.mxu0 0.0
        %740 = vmatpush2.msra.mxu0 0.0
        %741 = vmatprep.subr.mxu0 0.0
        %742 = vmatpush2.msra.mxu0 0.0
        %743 = vmatprep.subr.mxu0 0.0
        %744 = vmatpush2.msra.mxu0 0.0
        %745 = vmatprep.subr.mxu0 0.0
        %746 = vmatpush2.msra.mxu0 0.0
        %747 = vmatprep.mubr.f32.mxu0 0.0
        %748 = vmatmul.mubr.f32.gmra.mxu0 %v494
        %v749 = vpop.f32.mrf.mxu0
        %v750 = vadd.f32 0.0, %v749
        %v751 = vpop.f32.mrf.mxu0
        %v752 = vadd.f32 0.0, %v751
        %753 = vmatprep.mubr.f32.mxu0 0.0
        %754 = vmatmul.mubr.f32.gmra.mxu0 %v497
        %v755 = vpop.f32.mrf.mxu0
        %v756 = vadd.f32 0.0, %v755
        %v757 = vpop.f32.mrf.mxu0
        %v758 = vadd.f32 0.0, %v757
        %759 = vmatprep.mubr.f32.mxu0 0.0
        %760 = vmatmul.mubr.f32.gmra.mxu0 %v500
        %v761 = vpop.f32.mrf.mxu0
        %v762 = vadd.f32 0.0, %v761
        %v763 = vpop.f32.mrf.mxu0
        %v764 = vadd.f32 0.0, %v763
        %765 = vmatprep.mubr.f32.mxu0 0.0
        %766 = vmatmul.mubr.f32.gmra.mxu0 %v503
        %v767 = vpop.f32.mrf.mxu0
        %v768 = vadd.f32 0.0, %v767
        %v769 = vpop.f32.mrf.mxu0
        %v770 = vadd.f32 0.0, %v769
        %771 = vdwg.mxu0
        %772 = vmatprep.subr.mxu0 0.0
        %773 = vmatpush1.msra.mxu0 0.0
        %774 = vmatprep.subr.mxu0 0.0
        %775 = vmatpush1.msra.mxu0 0.0
        %776 = vmatprep.subr.mxu0 0.0
        %777 = vmatpush1.msra.mxu0 0.0
        %778 = vmatprep.subr.mxu0 0.0
        %779 = vmatpush1.msra.mxu0 0.0
        %780 = vmatprep.subr.mxu0 0.0
        %781 = vmatpush1.msra.mxu0 0.0
        %782 = vmatprep.subr.mxu0 0.0
        %783 = vmatpush1.msra.mxu0 0.0
        %784 = vmatprep.subr.mxu0 0.0
        %785 = vmatpush1.msra.mxu0 0.0
        %786 = vmatprep.subr.mxu0 0.0
        %787 = vmatpush1.msra.mxu0 0.0
        %788 = vmatprep.subr.mxu0 0.0
        %789 = vmatpush1.msra.mxu0 0.0
        %790 = vmatprep.subr.mxu0 0.0
        %791 = vmatpush1.msra.mxu0 0.0
        %792 = vmatprep.subr.mxu0 0.0
        %793 = vmatpush1.msra.mxu0 0.0
        %794 = vmatprep.subr.mxu0 0.0
        %795 = vmatpush1.msra.mxu0 0.0
        %796 = vmatprep.subr.mxu0 %v486
        %797 = vmatpush1.msra.mxu0 %v474
        %798 = vmatprep.subr.mxu0 %v480
        %799 = vmatpush1.msra.mxu0 %v468
        %800 = vmatprep.subr.mxu0 %v484
        %801 = vmatpush1.msra.mxu0 %v472
        %802 = vmatprep.subr.mxu0 %v478
        %803 = vmatpush1.msra.mxu0 %v466
        %804 = vmatprep.subr.mxu0 0.0
        %805 = vmatpush2.msra.mxu0 0.0
        %806 = vmatprep.subr.mxu0 0.0
        %807 = vmatpush2.msra.mxu0 0.0
        %808 = vmatprep.subr.mxu0 0.0
        %809 = vmatpush2.msra.mxu0 0.0
        %810 = vmatprep.subr.mxu0 0.0
        %811 = vmatpush2.msra.mxu0 0.0
        %812 = vmatprep.subr.mxu0 0.0
        %813 = vmatpush2.msra.mxu0 0.0
        %814 = vmatprep.subr.mxu0 0.0
        %815 = vmatpush2.msra.mxu0 0.0
        %816 = vmatprep.subr.mxu0 0.0
        %817 = vmatpush2.msra.mxu0 0.0
        %818 = vmatprep.subr.mxu0 0.0
        %819 = vmatpush2.msra.mxu0 0.0
        %820 = vmatprep.subr.mxu0 0.0
        %821 = vmatpush2.msra.mxu0 0.0
        %822 = vmatprep.subr.mxu0 0.0
        %823 = vmatpush2.msra.mxu0 0.0
        %824 = vmatprep.subr.mxu0 0.0
        %825 = vmatpush2.msra.mxu0 0.0
        %826 = vmatprep.subr.mxu0 0.0
        %827 = vmatpush2.msra.mxu0 0.0
        %828 = vmatprep.subr.mxu0 0.0
        %829 = vmatpush2.msra.mxu0 0.0
        %830 = vmatprep.subr.mxu0 0.0
        %831 = vmatpush2.msra.mxu0 0.0
        %832 = vmatprep.subr.mxu0 0.0
        %833 = vmatpush2.msra.mxu0 0.0
        %834 = vmatprep.subr.mxu0 0.0
        %835 = vmatpush2.msra.mxu0 0.0
        %836 = vmatprep.mubr.f32.mxu0 0.0
        %837 = vmatmul.mubr.f32.gmra.mxu0 %v494
        %v838 = vpop.f32.mrf.mxu0
        %v839 = vadd.f32 0.0, %v838
        %v840 = vpop.f32.mrf.mxu0
        %v841 = vadd.f32 0.0, %v840
        %842 = vmatprep.mubr.f32.mxu0 0.0
        %843 = vmatmul.mubr.f32.gmra.mxu0 %v497
        %v844 = vpop.f32.mrf.mxu0
        %v845 = vadd.f32 0.0, %v844
        %v846 = vpop.f32.mrf.mxu0
        %v847 = vadd.f32 0.0, %v846
        %848 = vmatprep.mubr.f32.mxu0 0.0
        %849 = vmatmul.mubr.f32.gmra.mxu0 %v500
        %v850 = vpop.f32.mrf.mxu0
        %v851 = vadd.f32 0.0, %v850
        %v852 = vpop.f32.mrf.mxu0
        %v853 = vadd.f32 0.0, %v852
        %854 = vmatprep.mubr.f32.mxu0 0.0
        %855 = vmatmul.mubr.f32.gmra.mxu0 %v503
        %v856 = vpop.f32.mrf.mxu0
        %v857 = vadd.f32 0.0, %v856
        %v858 = vpop.f32.mrf.mxu0
        %v859 = vadd.f32 0.0, %v858
        %860 = vdwg.mxu0
        %v861 = vmul.f32 %v572, %v572
        %v862 = vmul.f32 %v574, %v574
        %v863 = vmul.f32 %v661, %v661
        %v864 = vmul.f32 %v663, %v663
        %v865 = vmul.f32 %v750, %v750
        %v866 = vmul.f32 %v752, %v752
        %v867 = vmul.f32 %v839, %v839
        %v868 = vmul.f32 %v841, %v841
        %v869 = vmul.f32 %v578, %v578
        %v870 = vmul.f32 %v580, %v580
        %v871 = vmul.f32 %v667, %v667
        %v872 = vmul.f32 %v669, %v669
        %v873 = vmul.f32 %v756, %v756
        %v874 = vmul.f32 %v758, %v758
        %v875 = vmul.f32 %v845, %v845
        %v876 = vmul.f32 %v847, %v847
        %v877 = vmul.f32 %v584, %v584
        %v878 = vmul.f32 %v586, %v586
        %v879 = vmul.f32 %v673, %v673
        %v880 = vmul.f32 %v675, %v675
        %v881 = vmul.f32 %v762, %v762
        %v882 = vmul.f32 %v764, %v764
        %v883 = vmul.f32 %v851, %v851
        %v884 = vmul.f32 %v853, %v853
        %v885 = vmul.f32 %v590, %v590
        %v886 = vmul.f32 %v592, %v592
        %v887 = vmul.f32 %v679, %v679
        %v888 = vmul.f32 %v681, %v681
        %v889 = vmul.f32 %v768, %v768
        %v890 = vmul.f32 %v770, %v770
        %v891 = vmul.f32 %v857, %v857
        %v892 = vmul.f32 %v859, %v859
        %v893 = vadd.f32 %v861, %v877
        %v894 = vadd.f32 %v862, %v878
        %v895 = vadd.f32 %v863, %v879
        %v896 = vadd.f32 %v864, %v880
        %v897 = vadd.f32 %v865, %v881
        %v898 = vadd.f32 %v866, %v882
        %v899 = vadd.f32 %v867, %v883
        %v900 = vadd.f32 %v868, %v884
        %v901 = vadd.f32 %v869, %v885
        %v902 = vadd.f32 %v870, %v886
        %v903 = vadd.f32 %v871, %v887
        %v904 = vadd.f32 %v872, %v888
        %v905 = vadd.f32 %v873, %v889
        %v906 = vadd.f32 %v874, %v890
        %v907 = vadd.f32 %v875, %v891
        %v908 = vadd.f32 %v876, %v892
        %v909 = vrsqrt.pop %v893
        %v910 = vmul.f32 %v893, %v909
        %vm911 = vcmp.eq.f32.partialorder %v893, inf
        %v912 = vsel %vm911, %v893, %v910
        %vm913 = vcmp.eq.f32.partialorder %v893, 0.0
        %v914 = vand.u32 %v893, 2147483648
        %v915 = vsel %vm913, %v914, %v912
        %v916 = vrsqrt.pop %v894
        %v917 = vmul.f32 %v894, %v916
        %vm918 = vcmp.eq.f32.partialorder %v894, inf
        %v919 = vsel %vm918, %v894, %v917
        %vm920 = vcmp.eq.f32.partialorder %v894, 0.0
        %v921 = vand.u32 %v894, 2147483648
        %v922 = vsel %vm920, %v921, %v919
        %v923 = vrsqrt.pop %v895
        %v924 = vmul.f32 %v895, %v923
        %vm925 = vcmp.eq.f32.partialorder %v895, inf
        %v926 = vsel %vm925, %v895, %v924
        %vm927 = vcmp.eq.f32.partialorder %v895, 0.0
        %v928 = vand.u32 %v895, 2147483648
        %v929 = vsel %vm927, %v928, %v926
        %v930 = vrsqrt.pop %v896
        %v931 = vmul.f32 %v896, %v930
        %vm932 = vcmp.eq.f32.partialorder %v896, inf
        %v933 = vsel %vm932, %v896, %v931
        %vm934 = vcmp.eq.f32.partialorder %v896, 0.0
        %v935 = vand.u32 %v896, 2147483648
        %v936 = vsel %vm934, %v935, %v933
        %v937 = vrsqrt.pop %v897
        %v938 = vmul.f32 %v897, %v937
        %vm939 = vcmp.eq.f32.partialorder %v897, inf
        %v940 = vsel %vm939, %v897, %v938
        %vm941 = vcmp.eq.f32.partialorder %v897, 0.0
        %v942 = vand.u32 %v897, 2147483648
        %v943 = vsel %vm941, %v942, %v940
        %v944 = vrsqrt.pop %v898
        %v945 = vmul.f32 %v898, %v944
        %vm946 = vcmp.eq.f32.partialorder %v898, inf
        %v947 = vsel %vm946, %v898, %v945
        %vm948 = vcmp.eq.f32.partialorder %v898, 0.0
        %v949 = vand.u32 %v898, 2147483648
        %v950 = vsel %vm948, %v949, %v947
        %v951 = vrsqrt.pop %v899
        %v952 = vmul.f32 %v899, %v951
        %vm953 = vcmp.eq.f32.partialorder %v899, inf
        %v954 = vsel %vm953, %v899, %v952
        %vm955 = vcmp.eq.f32.partialorder %v899, 0.0
        %v956 = vand.u32 %v899, 2147483648
        %v957 = vsel %vm955, %v956, %v954
        %v958 = vrsqrt.pop %v900
        %v959 = vmul.f32 %v900, %v958
        %vm960 = vcmp.eq.f32.partialorder %v900, inf
        %v961 = vsel %vm960, %v900, %v959
        %vm962 = vcmp.eq.f32.partialorder %v900, 0.0
        %v963 = vand.u32 %v900, 2147483648
        %v964 = vsel %vm962, %v963, %v961
        %v965 = vrsqrt.pop %v901
        %v966 = vmul.f32 %v901, %v965
        %vm967 = vcmp.eq.f32.partialorder %v901, inf
        %v968 = vsel %vm967, %v901, %v966
        %vm969 = vcmp.eq.f32.partialorder %v901, 0.0
        %v970 = vand.u32 %v901, 2147483648
        %v971 = vsel %vm969, %v970, %v968
        %v972 = vrsqrt.pop %v902
        %v973 = vmul.f32 %v902, %v972
        %vm974 = vcmp.eq.f32.partialorder %v902, inf
        %v975 = vsel %vm974, %v902, %v973
        %vm976 = vcmp.eq.f32.partialorder %v902, 0.0
        %v977 = vand.u32 %v902, 2147483648
        %v978 = vsel %vm976, %v977, %v975
        %v979 = vrsqrt.pop %v903
        %v980 = vmul.f32 %v903, %v979
        %vm981 = vcmp.eq.f32.partialorder %v903, inf
        %v982 = vsel %vm981, %v903, %v980
        %vm983 = vcmp.eq.f32.partialorder %v903, 0.0
        %v984 = vand.u32 %v903, 2147483648
        %v985 = vsel %vm983, %v984, %v982
        %v986 = vrsqrt.pop %v904
        %v987 = vmul.f32 %v904, %v986
        %vm988 = vcmp.eq.f32.partialorder %v904, inf
        %v989 = vsel %vm988, %v904, %v987
        %vm990 = vcmp.eq.f32.partialorder %v904, 0.0
        %v991 = vand.u32 %v904, 2147483648
        %v992 = vsel %vm990, %v991, %v989
        %v993 = vrsqrt.pop %v905
        %v994 = vmul.f32 %v905, %v993
        %vm995 = vcmp.eq.f32.partialorder %v905, inf
        %v996 = vsel %vm995, %v905, %v994
        %vm997 = vcmp.eq.f32.partialorder %v905, 0.0
        %v998 = vand.u32 %v905, 2147483648
        %v999 = vsel %vm997, %v998, %v996
        %v1000 = vrsqrt.pop %v906
        %v1001 = vmul.f32 %v906, %v1000
        %vm1002 = vcmp.eq.f32.partialorder %v906, inf
        %v1003 = vsel %vm1002, %v906, %v1001
        %vm1004 = vcmp.eq.f32.partialorder %v906, 0.0
        %v1005 = vand.u32 %v906, 2147483648
        %v1006 = vsel %vm1004, %v1005, %v1003
        %v1007 = vrsqrt.pop %v907
        %v1008 = vmul.f32 %v907, %v1007
        %vm1009 = vcmp.eq.f32.partialorder %v907, inf
        %v1010 = vsel %vm1009, %v907, %v1008
        %vm1011 = vcmp.eq.f32.partialorder %v907, 0.0
        %v1012 = vand.u32 %v907, 2147483648
        %v1013 = vsel %vm1011, %v1012, %v1010
        %v1014 = vrsqrt.pop %v908
        %v1015 = vmul.f32 %v908, %v1014
        %vm1016 = vcmp.eq.f32.partialorder %v908, inf
        %v1017 = vsel %vm1016, %v908, %v1015
        %vm1018 = vcmp.eq.f32.partialorder %v908, 0.0
        %v1019 = vand.u32 %v908, 2147483648
        %v1020 = vsel %vm1018, %v1019, %v1017
        %v1021 = vld [vmem:[#allocation2] sm:$0xff]
        %v1022 = vld [vmem:[#allocation2 + $0x8] sm:$0xff]
        %v1023 = vld [vmem:[#allocation2 + $0x10] sm:$0xff]
        %v1024 = vld [vmem:[#allocation2 + $0x18] sm:$0xff]
        %v1025 = vld [vmem:[#allocation2 + $0x20] sm:$0xff]
        %v1026 = vld [vmem:[#allocation2 + $0x28] sm:$0xff]
        %v1027 = vld [vmem:[#allocation2 + $0x30] sm:$0xff]
        %v1028 = vld [vmem:[#allocation2 + $0x38] sm:$0xff]
        %v1029 = vsub.f32 %v915, %v943
        %v1030 = vsub.f32 %v922, %v950
        %v1031 = vsub.f32 %v929, %v957
        %v1032 = vsub.f32 %v936, %v964
        %v1033 = vsub.f32 %v971, %v999
        %v1034 = vsub.f32 %v978, %v1006
        %v1035 = vsub.f32 %v985, %v1013
        %v1036 = vsub.f32 %v992, %v1020
        %v1037 = vand.u32 2147483647, %v1029
        %v1038 = vand.u32 2147483647, %v1030
        %v1039 = vand.u32 2147483647, %v1031
        %v1040 = vand.u32 2147483647, %v1032
        %v1041 = vand.u32 2147483647, %v1033
        %v1042 = vand.u32 2147483647, %v1034
        %v1043 = vand.u32 2147483647, %v1035
        %v1044 = vand.u32 2147483647, %v1036
        %v1045 = vadd.f32 %v1021, %v1037
        %v1046 = vadd.f32 %v1022, %v1038
        %v1047 = vadd.f32 %v1023, %v1039
        %v1048 = vadd.f32 %v1024, %v1040
        %v1049 = vadd.f32 %v1025, %v1041
        %v1050 = vadd.f32 %v1026, %v1042
        %v1051 = vadd.f32 %v1027, %v1043
        %v1052 = vadd.f32 %v1028, %v1044
        %1053 = vst [vmem:[#allocation2] sm:$0xff] %v1045
        %1054 = vst [vmem:[#allocation2 + $0x8] sm:$0xff] %v1046
        %1055 = vst [vmem:[#allocation2 + $0x10] sm:$0xff] %v1047
        %1056 = vst [vmem:[#allocation2 + $0x18] sm:$0xff] %v1048
        %1057 = vst [vmem:[#allocation2 + $0x20] sm:$0xff] %v1049
        %1058 = vst [vmem:[#allocation2 + $0x28] sm:$0xff] %v1050
        %1059 = vst [vmem:[#allocation2 + $0x30] sm:$0xff] %v1051
        %1060 = vst [vmem:[#allocation2 + $0x38] sm:$0xff] %v1052
        // Predicated region
        $region41: #{tpu_custom_call.1} parent=35 // pred_check
          %p1061 = pneg %p246
        $region42: #{tpu_custom_call.1} parent=35 // pred_check_branch
          %1063 = sbr.rel (%p1061) target = $region44
        $region43: #{tpu_custom_call.1} parent=35 // pred_region
          %v1064 = vld [vmem:[#allocation2] sm:$0xff]
          %v1065 = vld [vmem:[#allocation2 + $0x8] sm:$0xff]
          %v1066 = vld [vmem:[#allocation2 + $0x10] sm:$0xff]
          %v1067 = vld [vmem:[#allocation2 + $0x18] sm:$0xff]
          %v1068 = vld [vmem:[#allocation2 + $0x20] sm:$0xff]
          %v1069 = vld [vmem:[#allocation2 + $0x28] sm:$0xff]
          %v1070 = vld [vmem:[#allocation2 + $0x30] sm:$0xff]
          %v1071 = vld [vmem:[#allocation2 + $0x38] sm:$0xff]
          %v1072 = vadd.f32 %v1064, %v1065
          %v1073 = vadd.f32 %v1072, %v1066
          %v1074 = vadd.f32 %v1073, %v1067
          %v1075 = vadd.f32 %v1074, %v1068
          %v1076 = vadd.f32 %v1075, %v1069
          %v1077 = vadd.f32 %v1076, %v1070
          %v1078 = vadd.f32 %v1077, %v1071
          %1079 = vadd.xlane.f32.xlu0 %v1078
          %v1080 = vpop.xlane.xlu0 %1079
          %v1081 = vrot.slane %v1080, 4
          %v1082 = vadd.f32 %v1080, %v1081
          %v1083 = vrot.slane %v1082, 2
          %v1084 = vadd.f32 %v1082, %v1083
          %v1085 = vrot.slane %v1084, 1
          %v1086 = vadd.f32 %v1084, %v1085
          %s1087 = vtos %v1086
          %s1088 = smul.f32 %s1087, 0.00086805556
          %v1089 = vstv %s1088
          %v1090 = vadd.f32 %v1089, 0.0
          %1091 = vst [vmem:[%s229] sm:$0xff] %v1090
        $region44: #{tpu_custom_call.1} parent=35 // pred_fallthru
          _
        %s1092 = sand.u32 %s136, 1
        %s1093 = scalar_lea.sflag [#allocation4], %s1092
        %s1094 = sand.u32 %s136, 1
        %s1095 = smul.addr %s1094, 8
        %s1096 = scalar_lea.vmem [#allocation3], %s1095
        // Predicated region
        $region45: #{tpu_custom_call.1} parent=35 // pred_check
          %p1097 = pneg %p146
        $region46: #{tpu_custom_call.1} parent=35 // pred_check_branch
          %1099 = sbr.rel (%p1097) target = $region48
        $region47: #{tpu_custom_call.1} parent=35 // pred_region
          %s1101 = ssub.s32 128, 128
          %1102 = vsyncadd %s1093, %s1101
          %s1103 = smul.addr %s22, 128
          %s1104 = scalar_lea.hbm %s4, %s1103
          %s1106 = sshll.u32 %s1096, 4
          %s1107 = int_to_ptr.vmem [resolvable:$true] %s1106
          %1109 = dma.vmem_to_hbm [thread:$0]  %s1107, 128, %s1104, %s1093
        $region48: #{tpu_custom_call.1} parent=35 // pred_fallthru
          _
      $region36: #{tpu_custom_call.1} parent=5 // pred_fallthru
        _
      %p1110 = scmp.le.s32.totalorder 2, %s13
      // Predicated region
      $region49: #{tpu_custom_call.1} parent=5 // pred_check
        %p1111 = pneg %p1110
      $region50: #{tpu_custom_call.1} parent=5 // pred_check_branch
        %1113 = sbr.rel (%p1111) target = $region52
      $region51: #{tpu_custom_call.1} parent=5 // pred_region
        %s1114 = ssub.s32 %s13, 2
        // Predicated region
        $region53: #{tpu_custom_call.1} parent=51 // pred_check
          %p1115 = pneg %p152
        $region54: #{tpu_custom_call.1} parent=51 // pred_check_branch
          %1117 = sbr.rel (%p1115) target = $region56
        $region55: #{tpu_custom_call.1} parent=51 // pred_region
          %s1118 = sand.u32 %s137, 1
          %s1119 = scalar_lea.sflag [#allocation4], %s1118
          %s1120 = sand.u32 %s137, 1
          %s1121 = smul.addr %s1120, 8
          %s1122 = scalar_lea.vmem [#allocation3], %s1121
          %1123 = dma.done %s1119, 128
        $region56: #{tpu_custom_call.1} parent=51 // pred_fallthru
          _
      $region52: #{tpu_custom_call.1} parent=5 // pred_fallthru
        _
    $region6: #{tpu_custom_call.1} parent=1 // loop_footer
      %s17 = sadd.s32 1, %s13
    $region7: #{tpu_custom_call.1} parent=1 // loop_footer_branch
      %12 = sbr.rel target = $region3
    $region8: #{tpu_custom_call.1} parent=1 // loop_exit
      _
    %1124 = vsyncpa [#allocation4], 1
    %s1125 = scalar_lea.sflag [#allocation4], 1
    %1126 = vsyncpa %s1125, 1

</llo_original>
